<compile_context>
chip_gen: v5e
topology: v5e:2x2
jax: 0.10.0
libtpu: 0.0.40
codegen_flags: <defaults>
</compile_context>

<pallas_src>
import functools

import jax
import jax.numpy as jnp
from jax import lax
from jax.experimental import pallas as pl
from jax.experimental.pallas import tpu as pltpu


def _round_up(x, m):
    return ((x + m - 1) // m) * m


# Contract last dim of x (K) with last dim of w (K); w stays (N, K) -> the MXU
# consumes the transposed operand natively, no materialized weight.T.
_DN = (((1,), (1,)), ((), ()))


# ----------------------------- kernel bodies --------------------------------

def _mm_kernel_single_k(x_ref, w_ref, o_ref, *, apply_relu):
    out = lax.dot_general(x_ref[...], w_ref[...], _DN,
                          preferred_element_type=jnp.float32)
    if apply_relu:
        out = jnp.maximum(out, 0.0)
    o_ref[...] = out.astype(o_ref.dtype)


def _mm_bias_kernel_single_k(x_ref, w_ref, b_ref, o_ref, *, apply_relu):
    out = lax.dot_general(x_ref[...], w_ref[...], _DN,
                          preferred_element_type=jnp.float32)
    out = out + b_ref[...]                     # (1, tn) broadcasts over rows
    if apply_relu:
        out = jnp.maximum(out, 0.0)
    o_ref[...] = out.astype(o_ref.dtype)


def _mm_kernel_ktiled(x_ref, w_ref, o_ref, acc_ref, *, apply_relu):
    k = pl.program_id(2)

    @pl.when(k == 0)
    def _():
        acc_ref[...] = jnp.zeros_like(acc_ref)

    acc_ref[...] += lax.dot_general(x_ref[...], w_ref[...], _DN,
                                    preferred_element_type=jnp.float32)

    @pl.when(k == pl.num_programs(2) - 1)
    def _():
        out = acc_ref[...]
        if apply_relu:
            out = jnp.maximum(out, 0.0)
        o_ref[...] = out.astype(o_ref.dtype)


def _mm_bias_kernel_ktiled(x_ref, w_ref, b_ref, o_ref, acc_ref, *, apply_relu):
    k = pl.program_id(2)

    @pl.when(k == 0)
    def _():
        acc_ref[...] = jnp.zeros_like(acc_ref)

    acc_ref[...] += lax.dot_general(x_ref[...], w_ref[...], _DN,
                                    preferred_element_type=jnp.float32)

    @pl.when(k == pl.num_programs(2) - 1)
    def _():
        out = acc_ref[...] + b_ref[...]
        if apply_relu:
            out = jnp.maximum(out, 0.0)
        o_ref[...] = out.astype(o_ref.dtype)


# ------------------------------- wrapper -------------------------------------

def random_buffer_forward(x, weight, bias=None, *, activation="relu",
                          tm=256, tn=512, tk=1024, compute_dtype=None):
    """activation(x @ weight.T + bias), matching RandomBuffer.forward.

    x:      (B, in_features)
    weight: (out_features, in_features)   -- consumed in native (N, K) layout
    bias:   (out_features,) or None
    compute_dtype: e.g. jnp.bfloat16 for a bf16-MXU / f32-accumulate fast path.
    """
    out_dtype = weight.dtype
    x = x.astype(out_dtype)                         # X = X.to(self.weight)
    if compute_dtype is not None:
        x = x.astype(compute_dtype)
        weight = weight.astype(compute_dtype)

    B, K = x.shape
    N, K_w = weight.shape
    assert K == K_w, f"in_features mismatch: {K} vs {K_w}"

    # Clamp tiles to the (8, 128)-aligned problem size; big tiles by default.
    tm = min(tm, _round_up(B, 8))
    tn = min(tn, _round_up(N, 128))
    tk = min(tk, _round_up(K, 128))

    # Pad (zeros in K contribute nothing to the contraction; extra rows/cols
    # are sliced off afterwards).
    B_p, N_p, K_p = _round_up(B, tm), _round_up(N, tn), _round_up(K, tk)
    if (B_p, K_p) != (B, K):
        x = jnp.pad(x, ((0, B_p - B), (0, K_p - K)))
    if (N_p, K_p) != (N, K):
        weight = jnp.pad(weight, ((0, N_p - N), (0, K_p - K)))

    has_bias = bias is not None
    if has_bias:
        b2 = bias.astype(jnp.float32).reshape(1, N)
        if N_p != N:
            b2 = jnp.pad(b2, ((0, 0), (0, N_p - N)))

    m_t, n_t, k_t = B_p // tm, N_p // tn, K_p // tk
    apply_relu = (activation == "relu")

    # Explicit VMEM budget: double-buffered inputs + outputs + f32 accumulator.
    in_sz = jnp.dtype(x.dtype).itemsize
    out_sz = jnp.dtype(out_dtype).itemsize
    est = 2 * (tm * tk + tn * tk) * in_sz + 2 * tm * tn * out_sz + tm * tn * 4
    if has_bias:
        est += 2 * tn * 4
    vmem_limit = int(min(max(2 * est, 32 << 20), 64 << 20))

    # Advisory cost hint for XLA's scheduler.
    cost = pl.CostEstimate(
        flops=2 * B_p * N_p * K_p,
        transcendentals=0,
        bytes_accessed=(B_p * K_p + N_p * K_p) * in_sz + B_p * N_p * out_sz,
    )

    # Grid order: weight tile index (j) on the OUTER axis, batch tile index (i)
    # inner.  When k_t == 1 the weight block index is unchanged across the inner
    # loop, so Pallas keeps the (large) weight tile resident in VMEM instead of
    # re-reading it from HBM for every batch tile.
    if k_t == 1:
        grid = (n_t, m_t)
        x_spec = pl.BlockSpec((tm, tk), lambda j, i: (i, 0))
        w_spec = pl.BlockSpec((tn, tk), lambda j, i: (j, 0))
        o_spec = pl.BlockSpec((tm, tn), lambda j, i: (i, j))
        dims = ("parallel", "parallel")
        scratch = []
        if has_bias:
            b_spec = pl.BlockSpec((1, tn), lambda j, i: (0, j))
            kernel = functools.partial(_mm_bias_kernel_single_k, apply_relu=apply_relu)
            in_specs, args = [x_spec, w_spec, b_spec], (x, weight, b2)
        else:
            kernel = functools.partial(_mm_kernel_single_k, apply_relu=apply_relu)
            in_specs, args = [x_spec, w_spec], (x, weight)
    else:
        grid = (n_t, m_t, k_t)
        x_spec = pl.BlockSpec((tm, tk), lambda j, i, k: (i, k))
        w_spec = pl.BlockSpec((tn, tk), lambda j, i, k: (j, k))
        o_spec = pl.BlockSpec((tm, tn), lambda j, i, k: (i, j))
        dims = ("parallel", "parallel", "arbitrary")
        scratch = [pltpu.VMEM((tm, tn), jnp.float32)]
        if has_bias:
            b_spec = pl.BlockSpec((1, tn), lambda j, i, k: (0, j))
            kernel = functools.partial(_mm_bias_kernel_ktiled, apply_relu=apply_relu)
            in_specs, args = [x_spec, w_spec, b_spec], (x, weight, b2)
        else:
            kernel = functools.partial(_mm_kernel_ktiled, apply_relu=apply_relu)
            in_specs, args = [x_spec, w_spec], (x, weight)

    out = pl.pallas_call(
        kernel,
        out_shape=jax.ShapeDtypeStruct((B_p, N_p), out_dtype),
        grid_spec=pltpu.PrefetchScalarGridSpec(
            num_scalar_prefetch=0,
            grid=grid,
            in_specs=in_specs,
            out_specs=o_spec,
            scratch_shapes=scratch,
        ),
        compiler_params=pltpu.CompilerParams(
            dimension_semantics=dims,
            vmem_limit_bytes=vmem_limit,
        ),
        cost_estimate=cost,
    )(*args)

    if (B_p, N_p) != (B, N):
        out = out[:B, :N]
    return out


if __name__ == "__main__":
    key = jax.random.PRNGKey(0)
    kx, kw, kb, kx2, kw2, kb2 = jax.random.split(key, 6)

    # ---- Case 1: RandomBuffer defaults (bias=False, relu), small shapes ----
    in_features, out_features, batch = 256, 128, 16
    x = jax.random.normal(kx, (batch, in_features), dtype=jnp.float32)
    bound = 1.0 / (in_features ** 0.5)          # kaiming-uniform style scale
    weight = jax.random.uniform(kw, (out_features, in_features),
                                minval=-bound, maxval=bound, dtype=jnp.float32)

    out = jax.block_until_ready(random_buffer_forward(x, weight, None))
    ref = jnp.maximum(x @ weight.T, 0.0)
    assert out.shape == (batch, out_features)
    assert jnp.allclose(out, ref, atol=1e-5, rtol=1e-5), "f32 no-bias mismatch"

    # ---- Case 2: bias=True + non-tiling shapes (exercises padding path) ----
    B2, K2, N2 = 5, 200, 96
    x2 = jax.random.normal(kx2, (B2, K2), dtype=jnp.float32)
    b2d = 1.0 / (K2 ** 0.5)
    w2 = jax.random.uniform(kw2, (N2, K2), minval=-b2d, maxval=b2d, dtype=jnp.float32)
    bias2 = jax.random.uniform(kb2, (N2,), minval=-b2d, maxval=b2d, dtype=jnp.float32)

    out2 = jax.block_until_ready(random_buffer_forward(x2, w2, bias2))
    ref2 = jnp.maximum(x2 @ w2.T + bias2, 0.0)
    assert out2.shape == (B2, N2)
    assert jnp.allclose(out2, ref2, atol=1e-5, rtol=1e-5), "f32 bias/pad mismatch"

    # ---- Case 3: larger shapes exercising the K-tiled accumulator path ----
    B3, K3, N3 = 512, 2048, 1024
    kx3, kw3 = jax.random.split(kb, 2)
    x3 = jax.random.normal(kx3, (B3, K3), dtype=jnp.float32)
    b3d = 1.0 / (K3 ** 0.5)
    w3 = jax.random.uniform(kw3, (N3, K3), minval=-b3d, maxval=b3d, dtype=jnp.float32)
    out3 = jax.block_until_ready(random_buffer_forward(x3, w3, None))
    ref3 = jnp.maximum(x3 @ w3.T, 0.0)
    assert jnp.allclose(out3, ref3, atol=1e-3, rtol=1e-3), "k-tiled path mismatch"

    # ---- Case 4: bf16 fast path (bf16 MXU inputs, f32 accumulation) ----
    out4 = jax.block_until_ready(
        random_buffer_forward(x, weight, None, compute_dtype=jnp.bfloat16))
    assert jnp.allclose(out4, ref, atol=1e-1, rtol=1e-1), "bf16 path mismatch"

    print("KERNEL_OK")
</pallas_src>

<mosaic_0001>
module attributes {stable_mosaic.version = 11 : i64} {
  func.func @_mm_kernel_single_k(%arg0: i32, %arg1: i32, %arg2: memref<16x256xf32, #tpu.memory_space<vmem>>, %arg3: memref<128x256xf32, #tpu.memory_space<vmem>>, %arg4: memref<16x128xf32, #tpu.memory_space<vmem>>) attributes {dimension_semantics = [#tpu.dimension_semantics<parallel>, #tpu.dimension_semantics<parallel>], iteration_bounds = array<i64: 1, 1>, scalar_prefetch = 0 : i64, scratch_operands = 0 : i64, tpu.core_type = #tpu.core_type<tc>, window_params = [{transform_indices = @transform_0, window_bounds = array<i64: 16, 256>}, {transform_indices = @transform_1, window_bounds = array<i64: 128, 256>}, {transform_indices = @transform_2, window_bounds = array<i64: 16, 128>}]} {
    %c0 = arith.constant 0 : index
    %c0_0 = arith.constant 0 : index
    %0 = vector.load %arg2[%c0, %c0_0] : memref<16x256xf32, #tpu.memory_space<vmem>>, vector<16x256xf32>
    %c0_1 = arith.constant 0 : index
    %c0_2 = arith.constant 0 : index
    %1 = vector.load %arg3[%c0_1, %c0_2] : memref<128x256xf32, #tpu.memory_space<vmem>>, vector<128x256xf32>
    %cst = arith.constant dense<0.000000e+00> : vector<16x128xf32>
    %2 = tpu.matmul %0, %1, %cst {dimension_numbers = #tpu.dot_dimension_numbers<[1], [1], [0], [0], [0, 0, 1, 0], [], []>} : vector<16x256xf32>, vector<128x256xf32>, vector<16x128xf32> -> vector<16x128xf32>
    %cst_3 = arith.constant 0.000000e+00 : f32
    %3 = vector.broadcast %cst_3 : f32 to vector<16x128xf32>
    %4 = arith.maximumf %2, %3 : vector<16x128xf32>
    %c0_4 = arith.constant 0 : index
    %c0_5 = arith.constant 0 : index
    %5 = vector.load %arg4[%c0_4, %c0_5] : memref<16x128xf32, #tpu.memory_space<vmem>>, vector<16x128xf32>
    tpu.vector_store %arg4[%c0_4, %c0_5], %4 {strides = array<i32>} : memref<16x128xf32, #tpu.memory_space<vmem>>, vector<16x128xf32>,
    return
  }
  func.func @transform_0(%arg0: i32, %arg1: i32) -> (i32, i32) {
    %c0_i32 = arith.constant 0 : i32
    %c0_i32_0 = arith.constant 0 : i32
    return %arg1, %c0_i32 : i32, i32
  }
  func.func @transform_1(%arg0: i32, %arg1: i32) -> (i32, i32) {
    %c0_i32 = arith.constant 0 : i32
    %c0_i32_0 = arith.constant 0 : i32
    return %arg0, %c0_i32 : i32, i32
  }
  func.func @transform_2(%arg0: i32, %arg1: i32) -> (i32, i32) {
    %c0_i32 = arith.constant 0 : i32
    return %arg1, %arg0 : i32, i32
  }
}

</mosaic_0001>

<llo_original>
// kernel: tpu_custom_call.1
$region0: #{tpu_custom_call.1}
  #allocation0 [shape = 'u32[]', space=smem, size = 0x4, offset = 0x4, fixed_abs, tag = 'smem constant byte address 0x4 - core index']
  #allocation1 [shape = 'u32[72,128]{1,0:T(1,128)}', space=vmem, size = 0x9000, scoped, tag = 'internal scratch']
  %s0 = inlined_call_operand.hbm [shape: f32[16,256], index: 0, kind: input, shape index: {}]
  %s1 = inlined_call_operand.hbm [shape: f32[128,256], index: 1, kind: input, shape index: {}]
  %s2 = inlined_call_operand.hbm [shape: f32[16,128], index: 2, kind: output, shape index: {}]
  %s3 = sld [smem:[#allocation0]]
  $region26: #{tpu_custom_call.1} parent=0
    _
  %s5 = ssub.s32 1, %s3
  %s6 = scalar_select 0, %s5, %s3
  $region1: #{tpu_custom_call.1} parent=0
    #allocation2 [shape = 'u8[16384]{0}', space=vmem, size = 0x4000, scoped, tag = 'input window, operand 0, single buffered']
    #allocation3 [shape = 's32[1]{0}', space=sflag, size = 0x4, scoped, tag = 'scoped memory for tpu_custom_call.1']
    #allocation4 [shape = 's32[1]{0}', space=sflag, size = 0x4, scoped, tag = 'scoped memory for tpu_custom_call.1']
    #allocation5 [shape = 'u8[131072]{0}', space=vmem, size = 0x20000, scoped, tag = 'input window, operand 1, single buffered']
    #allocation6 [shape = 's32[1]{0}', space=sflag, size = 0x4, scoped, tag = 'scoped memory for tpu_custom_call.1']
    #allocation7 [shape = 'u8[8192]{0}', space=vmem, size = 0x2000, scoped, tag = 'output window, operand 0, single buffered']
    %7 = vsyncpa [#allocation3], 0
    %8 = vsyncpa [#allocation6], 0
    %9 = vsyncpa [#allocation4], 0
    // Predicated region
    $region2: #{tpu_custom_call.1} parent=1 // pred_check
      _
    $region3: #{tpu_custom_call.1} parent=1 // pred_check_branch
      %11 = sbr.rel (0) target = $region5
    $region4: #{tpu_custom_call.1} parent=1 // pred_region
      %13 = vsyncadd [#allocation3], 0
      %s14 = sshll.u32 %s0, 4
      %s15 = int_to_ptr.hbm [resolvable:$true] %s14
      %s16 = sshll.u32 [#allocation2], 4
      %s17 = int_to_ptr.vmem [resolvable:$true] %s16
      %22 = dma.hbm_to_vmem [thread:$0]  %s15, 512, %s17, [#allocation3], 256, 256, 16
    $region5: #{tpu_custom_call.1} parent=1 // pred_fallthru
      _
    // Predicated region
    $region6: #{tpu_custom_call.1} parent=1 // pred_check
      _
    $region7: #{tpu_custom_call.1} parent=1 // pred_check_branch
      %24 = sbr.rel (0) target = $region9
    $region8: #{tpu_custom_call.1} parent=1 // pred_region
      %26 = vsyncadd [#allocation6], 0
      %s27 = sshll.u32 %s1, 4
      %s28 = int_to_ptr.hbm [resolvable:$true] %s27
      %s29 = sshll.u32 [#allocation5], 4
      %s30 = int_to_ptr.vmem [resolvable:$true] %s29
      %35 = dma.hbm_to_vmem [thread:$0]  %s28, 4096, %s30, [#allocation6], 256, 256, 16
    $region9: #{tpu_custom_call.1} parent=1 // pred_fallthru
      _
    // Predicated region
    $region10: #{tpu_custom_call.1} parent=1 // pred_check
      _
    $region11: #{tpu_custom_call.1} parent=1 // pred_check_branch
      %37 = sbr.rel (0) target = $region13
    $region12: #{tpu_custom_call.1} parent=1 // pred_region
      %39 = dma.done [#allocation3], 512
    $region13: #{tpu_custom_call.1} parent=1 // pred_fallthru
      _
    // Predicated region
    $region14: #{tpu_custom_call.1} parent=1 // pred_check
      _
    $region15: #{tpu_custom_call.1} parent=1 // pred_check_branch
      %41 = sbr.rel (0) target = $region17
    $region16: #{tpu_custom_call.1} parent=1 // pred_region
      %43 = dma.done [#allocation6], 4096
    $region17: #{tpu_custom_call.1} parent=1 // pred_fallthru
      _
    %v44 = vld [vmem:[#allocation2] sm:$0xff]
    %v45 = vld [vmem:[#allocation2 + $0x8] sm:$0xff]
    %v46 = vld [vmem:[#allocation2 + $0x10] sm:$0xff]
    %v47 = vld [vmem:[#allocation2 + $0x18] sm:$0xff]
    %v48 = vld [vmem:[#allocation5] sm:$0xff]
    %v49 = vld [vmem:[#allocation5 + $0x8] sm:$0xff]
    %v50 = vld [vmem:[#allocation5 + $0x10] sm:$0xff]
    %v51 = vld [vmem:[#allocation5 + $0x18] sm:$0xff]
    %v52 = vld [vmem:[#allocation5 + $0x20] sm:$0xff]
    %v53 = vld [vmem:[#allocation5 + $0x28] sm:$0xff]
    %v54 = vld [vmem:[#allocation5 + $0x30] sm:$0xff]
    %v55 = vld [vmem:[#allocation5 + $0x38] sm:$0xff]
    %v56 = vld [vmem:[#allocation5 + $0x40] sm:$0xff]
    %v57 = vld [vmem:[#allocation5 + $0x48] sm:$0xff]
    %v58 = vld [vmem:[#allocation5 + $0x50] sm:$0xff]
    %v59 = vld [vmem:[#allocation5 + $0x58] sm:$0xff]
    %v60 = vld [vmem:[#allocation5 + $0x60] sm:$0xff]
    %v61 = vld [vmem:[#allocation5 + $0x68] sm:$0xff]
    %v62 = vld [vmem:[#allocation5 + $0x70] sm:$0xff]
    %v63 = vld [vmem:[#allocation5 + $0x78] sm:$0xff]
    %v64 = vld [vmem:[#allocation5 + $0x80] sm:$0xff]
    %v65 = vld [vmem:[#allocation5 + $0x88] sm:$0xff]
    %v66 = vld [vmem:[#allocation5 + $0x90] sm:$0xff]
    %v67 = vld [vmem:[#allocation5 + $0x98] sm:$0xff]
    %v68 = vld [vmem:[#allocation5 + $0xa0] sm:$0xff]
    %v69 = vld [vmem:[#allocation5 + $0xa8] sm:$0xff]
    %v70 = vld [vmem:[#allocation5 + $0xb0] sm:$0xff]
    %v71 = vld [vmem:[#allocation5 + $0xb8] sm:$0xff]
    %v72 = vld [vmem:[#allocation5 + $0xc0] sm:$0xff]
    %v73 = vld [vmem:[#allocation5 + $0xc8] sm:$0xff]
    %v74 = vld [vmem:[#allocation5 + $0xd0] sm:$0xff]
    %v75 = vld [vmem:[#allocation5 + $0xd8] sm:$0xff]
    %v76 = vld [vmem:[#allocation5 + $0xe0] sm:$0xff]
    %v77 = vld [vmem:[#allocation5 + $0xe8] sm:$0xff]
    %v78 = vld [vmem:[#allocation5 + $0xf0] sm:$0xff]
    %v79 = vld [vmem:[#allocation5 + $0xf8] sm:$0xff]
    %80 = vmatpush.xpose.msra.mxu0 %v78
    %81 = vmatpush.xpose.msra.mxu0 %v76
    %82 = vmatpush.xpose.msra.mxu0 %v74
    %83 = vmatpush.xpose.msra.mxu0 %v72
    %84 = vmatpush.xpose.msra.mxu0 %v70
    %85 = vmatpush.xpose.msra.mxu0 %v68
    %86 = vmatpush.xpose.msra.mxu0 %v66
    %87 = vmatpush.xpose.msra.mxu0 %v64
    %88 = vmatpush.xpose.msra.mxu0 %v62
    %89 = vmatpush.xpose.msra.mxu0 %v60
    %90 = vmatpush.xpose.msra.mxu0 %v58
    %91 = vmatpush.xpose.msra.mxu0 %v56
    %92 = vmatpush.xpose.msra.mxu0 %v54
    %93 = vmatpush.xpose.msra.mxu0 %v52
    %94 = vmatpush.xpose.msra.mxu0 %v50
    %95 = vmatpush.xpose.msra.mxu0 %v48
    %96 = vmatmul.f32.gmra.mxu0 %v44
    %v97 = vpop.f32.mrf.mxu0
    %v98 = vadd.f32 0.0, %v97
    %99 = vmatmul.f32.gmra.mxu0 %v46
    %v100 = vpop.f32.mrf.mxu0
    %v101 = vadd.f32 0.0, %v100
    %102 = vdwg.mxu0
    %103 = vmatpush.xpose.msra.mxu0 %v79
    %104 = vmatpush.xpose.msra.mxu0 %v77
    %105 = vmatpush.xpose.msra.mxu0 %v75
    %106 = vmatpush.xpose.msra.mxu0 %v73
    %107 = vmatpush.xpose.msra.mxu0 %v71
    %108 = vmatpush.xpose.msra.mxu0 %v69
    %109 = vmatpush.xpose.msra.mxu0 %v67
    %110 = vmatpush.xpose.msra.mxu0 %v65
    %111 = vmatpush.xpose.msra.mxu0 %v63
    %112 = vmatpush.xpose.msra.mxu0 %v61
    %113 = vmatpush.xpose.msra.mxu0 %v59
    %114 = vmatpush.xpose.msra.mxu0 %v57
    %115 = vmatpush.xpose.msra.mxu0 %v55
    %116 = vmatpush.xpose.msra.mxu0 %v53
    %117 = vmatpush.xpose.msra.mxu0 %v51
    %118 = vmatpush.xpose.msra.mxu0 %v49
    %119 = vmatmul.f32.gmra.mxu0 %v45
    %v120 = vpop.f32.mrf.mxu0
    %v121 = vadd.f32 %v98, %v120
    %122 = vmatmul.f32.gmra.mxu0 %v47
    %v123 = vpop.f32.mrf.mxu0
    %v124 = vadd.f32 %v101, %v123
    %125 = vdwg.mxu0
    %v126 = vmax.f32 %v121, 0.0
    %v127 = vmax.f32 %v124, 0.0
    %128 = vst [vmem:[#allocation7] sm:$0xff] %v126
    %129 = vst [vmem:[#allocation7 + $0x8] sm:$0xff] %v127
    // Predicated region
    $region18: #{tpu_custom_call.1} parent=1 // pred_check
      _
    $region19: #{tpu_custom_call.1} parent=1 // pred_check_branch
      %131 = sbr.rel (0) target = $region21
    $region20: #{tpu_custom_call.1} parent=1 // pred_region
      %133 = vsyncadd [#allocation4], 0
      %s134 = sshll.u32 [#allocation7], 4
      %s135 = int_to_ptr.vmem [resolvable:$true] %s134
      %s136 = sshll.u32 %s2, 4
      %s137 = int_to_ptr.hbm [resolvable:$true] %s136
      %142 = dma.vmem_to_hbm [thread:$0]  %s135, 256, %s137, [#allocation4], 128, 128, 8
    $region21: #{tpu_custom_call.1} parent=1 // pred_fallthru
      _
    // Predicated region
    $region22: #{tpu_custom_call.1} parent=1 // pred_check
      _
    $region23: #{tpu_custom_call.1} parent=1 // pred_check_branch
      %144 = sbr.rel (0) target = $region25
    $region24: #{tpu_custom_call.1} parent=1 // pred_region
      %146 = dma.done [#allocation4], 256
    $region25: #{tpu_custom_call.1} parent=1 // pred_fallthru
      _
    %147 = vsyncpa [#allocation3], 1
    %148 = vsyncpa [#allocation6], 1
    %149 = vsyncpa [#allocation4], 1

</llo_original>
